<compile_context>
chip_gen: v6e
topology: v6e:2x2x1
jax: 0.10.0
libtpu: 0.0.40
codegen_flags: <defaults>
</compile_context>

<pallas_src>
import functools

import jax
import jax.numpy as jnp
from jax.experimental import pallas as pl
from jax.experimental.pallas import tpu as pltpu


def _rnn_q_kernel(obs_ref,     # (T*B, FP)   time-major flattened observation, F zero-padded to FP
                  wih_ref,     # (FP, H)     W_ih^T, rows F..FP zero
                  whh_ref,     # (H, H)      W_hh^T
                  act_ref,     # (B, A)      action
                  w1h_ref,     # (H, 32)     fc1 weight, h-columns, transposed
                  w1a_ref,     # (A, 32)     fc1 weight, action-columns, transposed
                  consts_ref,  # (8, 128)    packed: row0=b_ih+b_hh, row1=fc1_b, row2=fc2_w, [3,0]=fc2_b
                  out_ref):    # (B, 1)
    B = act_ref.shape[0]
    TB = obs_ref.shape[0]
    T = TB // B
    H = whh_ref.shape[0]
    HID1 = w1h_ref.shape[1]

    consts = consts_ref[...]
    brnn = consts[0:1, 0:H]        # (1, H)   b_ih + b_hh
    b1 = consts[1:2, 0:HID1]       # (1, 32)
    w2 = consts[2:3, 0:HID1]       # (1, 32)
    b2 = consts[3:4, 0:1]          # (1, 1)

    # Hoisted input projection: one MXU pass covers every timestep (no serial
    # dependence).  K = 128 is a full unmasked lane tile.  Accumulation is f32
    # regardless of the (optionally bf16) input dtype.
    x_proj = (jnp.dot(obs_ref[...], wih_ref[...],
                      preferred_element_type=jnp.float32)
              + brnn)                                            # (T*B, H) f32

    # Action half of fc1 — independent of the recurrence, so it is issued
    # before the serial chain and is off the critical tail entirely.
    act_part = (jnp.dot(act_ref[...], w1a_ref[...],
                        preferred_element_type=jnp.float32)
                + b1)                                            # (B, 32)

    # Serial recurrence, fully unrolled at trace time (T is static); the only
    # per-step MXU work is a single K=64 push (W_hh stays VMEM-resident).
    whh = whh_ref[...]
    h = jnp.zeros((B, H), jnp.float32)
    for t in range(T):
        pre = (x_proj[t * B:(t + 1) * B, :]
               + jnp.dot(h, whh, preferred_element_type=jnp.float32))
        h = jnp.maximum(pre, 0.0)

    # Tail: fc1 h-half (single K=64 tile) + precomputed action half, relu,
    # then fc2 as a VPU multiply + lane reduce (no lane-width-1 MXU push).
    z = jnp.maximum(
        jnp.dot(h, w1h_ref[...], preferred_element_type=jnp.float32) + act_part,
        0.0)                                                     # (B, 32)
    out_ref[...] = jnp.sum(z * w2, axis=1, keepdims=True) + b2


@functools.partial(jax.jit, static_argnames=("projection_dtype",))
def qnetwork_rnn_forward(observation, action, params,
                         projection_dtype=jnp.float32):
    """observation: (B, T, F) f32, action: (B, A) f32 -> (B, 1) f32.

    projection_dtype=jnp.bfloat16 quantizes only the hoisted input-projection
    matmul (f32 accumulation, recurrence stays f32); expect ~1e-2 drift vs. the
    f32 reference if enabled.
    """
    B, T, F = observation.shape
    A = action.shape[1]
    H = params["w_hh"].shape[0]          # 64
    HID1 = params["fc1_w"].shape[0]      # 32
    FP = ((F + 127) // 128) * 128        # 108 -> 128: full lane tile for the projection

    # --- parameter prep (glue; fuses under jit) -----------------------------
    wih_p = jnp.zeros((FP, H), jnp.float32).at[:F, :].set(params["w_ih"].T)
    whh_t = params["w_hh"].T                                   # (H, H)
    w1h = params["fc1_w"][:, :H].T                             # (H, 32)
    w1a = params["fc1_w"][:, H:].T                             # (A, 32)

    consts = jnp.zeros((8, 128), jnp.float32)
    consts = consts.at[0, :H].set(params["b_ih"] + params["b_hh"])
    consts = consts.at[1, :HID1].set(params["fc1_b"])
    consts = consts.at[2, :HID1].set(params["fc2_w"].reshape(HID1))
    consts = consts.at[3, 0].set(params["fc2_b"][0])

    # Time-major, flattened, feature-padded: row t*B+b == observation[b, t, :].
    obs_flat = jnp.transpose(observation, (1, 0, 2)).reshape(T * B, F)
    obs_flat = jnp.pad(obs_flat, ((0, 0), (0, FP - F)))

    obs_flat = obs_flat.astype(projection_dtype)
    wih_p = wih_p.astype(projection_dtype)

    vmem = pl.BlockSpec(memory_space=pltpu.MemorySpace.VMEM)

    # Total resident data is < 100 KB -> whole problem fits VMEM on every
    # generation (incl. v7x's 64 MiB); single invocation, no grid, no pipeline.
    return pl.pallas_call(
        _rnn_q_kernel,
        out_shape=jax.ShapeDtypeStruct((B, 1), jnp.float32),
        in_specs=[vmem] * 7,
        out_specs=vmem,
    )(obs_flat, wih_p, whh_t, action, w1h, w1a, consts)


def _reference_forward(observation, action, params):
    """Pure-JAX reference matching torch.nn.RNN(relu) + fc1 + fc2."""
    B, T, F = observation.shape
    H = params["w_hh"].shape[0]
    h = jnp.zeros((B, H), jnp.float32)
    for t in range(T):
        h = jnp.maximum(
            observation[:, t, :] @ params["w_ih"].T + params["b_ih"]
            + h @ params["w_hh"].T + params["b_hh"], 0.0)
    x = jnp.concatenate([h, action], axis=1)
    x = jnp.maximum(x @ params["fc1_w"].T + params["fc1_b"], 0.0)
    return x @ params["fc2_w"].T + params["fc2_b"]


def _init_params(key, n_features=108, n_actions=52, hidden=64):
    ks = jax.random.split(key, 8)
    s_rnn = 1.0 / jnp.sqrt(hidden)
    s_fc1 = 1.0 / jnp.sqrt(hidden + n_actions)
    s_fc2 = 1.0 / jnp.sqrt(32)
    u = lambda k, shape, s: jax.random.uniform(k, shape, jnp.float32, -s, s)
    return {
        "w_ih": u(ks[0], (hidden, n_features), s_rnn),
        "w_hh": u(ks[1], (hidden, hidden), s_rnn),
        "b_ih": u(ks[2], (hidden,), s_rnn),
        "b_hh": u(ks[3], (hidden,), s_rnn),
        "fc1_w": u(ks[4], (32, hidden + n_actions), s_fc1),
        "fc1_b": u(ks[5], (32,), s_fc1),
        "fc2_w": u(ks[6], (1, 32), s_fc2),
        "fc2_b": u(ks[7], (1,), s_fc2),
    }


if __name__ == "__main__":
    key = jax.random.PRNGKey(0)
    k_p, k_obs, k_act = jax.random.split(key, 3)

    n_features, n_actions = 108, 52
    B, T = 8, 8   # B=8 fills the sublane dimension of a vreg

    params = _init_params(k_p, n_features, n_actions)
    observation = jax.random.normal(k_obs, (B, T, n_features), jnp.float32)
    action = jax.random.normal(k_act, (B, n_actions), jnp.float32)

    out = qnetwork_rnn_forward(observation, action, params)
    out = jax.block_until_ready(out)

    ref = _reference_forward(observation, action, params)
    assert out.shape == (B, 1)
    assert jnp.allclose(out, ref, atol=1e-4, rtol=1e-4), (out, ref)

    print("KERNEL_OK")
</pallas_src>

<mosaic_0001>
module attributes {stable_mosaic.version = 11 : i64} {
  func.func @_rnn_q_kernel(%arg0: memref<64x128xf32, #tpu.memory_space<vmem>>, %arg1: memref<128x64xf32, #tpu.memory_space<vmem>>, %arg2: memref<64x64xf32, #tpu.memory_space<vmem>>, %arg3: memref<8x52xf32, #tpu.memory_space<vmem>>, %arg4: memref<64x32xf32, #tpu.memory_space<vmem>>, %arg5: memref<52x32xf32, #tpu.memory_space<vmem>>, %arg6: memref<8x128xf32, #tpu.memory_space<vmem>>, %arg7: memref<8x1xf32, #tpu.memory_space<vmem>>) attributes {dimension_semantics = [], scalar_prefetch = 0 : i64, scratch_operands = 0 : i64, tpu.core_type = #tpu.core_type<tc>} {
    %c0 = arith.constant 0 : index
    %c0_0 = arith.constant 0 : index
    %0 = vector.load %arg6[%c0, %c0_0] : memref<8x128xf32, #tpu.memory_space<vmem>>, vector<8x128xf32>
    %1 = vector.extract_strided_slice %0 {offsets = [0, 0], sizes = [1, 64], strides = [1, 1]} : vector<8x128xf32> to vector<1x64xf32>
    %2 = vector.extract_strided_slice %0 {offsets = [1, 0], sizes = [1, 32], strides = [1, 1]} : vector<8x128xf32> to vector<1x32xf32>
    %3 = vector.extract_strided_slice %0 {offsets = [2, 0], sizes = [1, 32], strides = [1, 1]} : vector<8x128xf32> to vector<1x32xf32>
    %4 = vector.extract_strided_slice %0 {offsets = [3, 0], sizes = [1, 1], strides = [1, 1]} : vector<8x128xf32> to vector<1x1xf32>
    %c0_1 = arith.constant 0 : index
    %c0_2 = arith.constant 0 : index
    %5 = vector.load %arg0[%c0_1, %c0_2] : memref<64x128xf32, #tpu.memory_space<vmem>>, vector<64x128xf32>
    %c0_3 = arith.constant 0 : index
    %c0_4 = arith.constant 0 : index
    %6 = vector.load %arg1[%c0_3, %c0_4] : memref<128x64xf32, #tpu.memory_space<vmem>>, vector<128x64xf32>
    %cst = arith.constant dense<0.000000e+00> : vector<64x64xf32>
    %7 = tpu.matmul %5, %6, %cst {dimension_numbers = #tpu.dot_dimension_numbers<[1], [0], [0], [1], [0, 0, 1, 1], [], []>} : vector<64x128xf32>, vector<128x64xf32>, vector<64x64xf32> -> vector<64x64xf32>
    %8 = vector.broadcast %1 : vector<1x64xf32> to vector<64x64xf32>
    %9 = arith.addf %7, %8 : vector<64x64xf32>
    %c0_5 = arith.constant 0 : index
    %c0_6 = arith.constant 0 : index
    %10 = vector.load %arg3[%c0_5, %c0_6] : memref<8x52xf32, #tpu.memory_space<vmem>>, vector<8x52xf32>
    %c0_7 = arith.constant 0 : index
    %c0_8 = arith.constant 0 : index
    %11 = vector.load %arg5[%c0_7, %c0_8] : memref<52x32xf32, #tpu.memory_space<vmem>>, vector<52x32xf32>
    %cst_9 = arith.constant dense<0.000000e+00> : vector<8x32xf32>
    %12 = tpu.matmul %10, %11, %cst_9 {dimension_numbers = #tpu.dot_dimension_numbers<[1], [0], [0], [1], [0, 0, 1, 1], [], []>} : vector<8x52xf32>, vector<52x32xf32>, vector<8x32xf32> -> vector<8x32xf32>
    %13 = vector.broadcast %2 : vector<1x32xf32> to vector<8x32xf32>
    %14 = arith.addf %12, %13 : vector<8x32xf32>
    %c0_10 = arith.constant 0 : index
    %c0_11 = arith.constant 0 : index
    %15 = vector.load %arg2[%c0_10, %c0_11] : memref<64x64xf32, #tpu.memory_space<vmem>>, vector<64x64xf32>
    %cst_12 = arith.constant 0.000000e+00 : f32
    %16 = vector.broadcast %cst_12 : f32 to vector<8x64xf32>
    %17 = vector.extract_strided_slice %9 {offsets = [0, 0], sizes = [8, 64], strides = [1, 1]} : vector<64x64xf32> to vector<8x64xf32>
    %cst_13 = arith.constant dense<0.000000e+00> : vector<8x64xf32>
    %18 = tpu.matmul %16, %15, %cst_13 {dimension_numbers = #tpu.dot_dimension_numbers<[1], [0], [0], [1], [0, 0, 1, 1], [], []>} : vector<8x64xf32>, vector<64x64xf32>, vector<8x64xf32> -> vector<8x64xf32>
    %19 = arith.addf %17, %18 : vector<8x64xf32>
    %cst_14 = arith.constant 0.000000e+00 : f32
    %20 = vector.broadcast %cst_14 : f32 to vector<8x64xf32>
    %21 = arith.maximumf %19, %20 : vector<8x64xf32>
    %22 = vector.extract_strided_slice %9 {offsets = [8, 0], sizes = [8, 64], strides = [1, 1]} : vector<64x64xf32> to vector<8x64xf32>
    %cst_15 = arith.constant dense<0.000000e+00> : vector<8x64xf32>
    %23 = tpu.matmul %21, %15, %cst_15 {dimension_numbers = #tpu.dot_dimension_numbers<[1], [0], [0], [1], [0, 0, 1, 1], [], []>} : vector<8x64xf32>, vector<64x64xf32>, vector<8x64xf32> -> vector<8x64xf32>
    %24 = arith.addf %22, %23 : vector<8x64xf32>
    %cst_16 = arith.constant 0.000000e+00 : f32
    %25 = vector.broadcast %cst_16 : f32 to vector<8x64xf32>
    %26 = arith.maximumf %24, %25 : vector<8x64xf32>
    %27 = vector.extract_strided_slice %9 {offsets = [16, 0], sizes = [8, 64], strides = [1, 1]} : vector<64x64xf32> to vector<8x64xf32>
    %cst_17 = arith.constant dense<0.000000e+00> : vector<8x64xf32>
    %28 = tpu.matmul %26, %15, %cst_17 {dimension_numbers = #tpu.dot_dimension_numbers<[1], [0], [0], [1], [0, 0, 1, 1], [], []>} : vector<8x64xf32>, vector<64x64xf32>, vector<8x64xf32> -> vector<8x64xf32>
    %29 = arith.addf %27, %28 : vector<8x64xf32>
    %cst_18 = arith.constant 0.000000e+00 : f32
    %30 = vector.broadcast %cst_18 : f32 to vector<8x64xf32>
    %31 = arith.maximumf %29, %30 : vector<8x64xf32>
    %32 = vector.extract_strided_slice %9 {offsets = [24, 0], sizes = [8, 64], strides = [1, 1]} : vector<64x64xf32> to vector<8x64xf32>
    %cst_19 = arith.constant dense<0.000000e+00> : vector<8x64xf32>
    %33 = tpu.matmul %31, %15, %cst_19 {dimension_numbers = #tpu.dot_dimension_numbers<[1], [0], [0], [1], [0, 0, 1, 1], [], []>} : vector<8x64xf32>, vector<64x64xf32>, vector<8x64xf32> -> vector<8x64xf32>
    %34 = arith.addf %32, %33 : vector<8x64xf32>
    %cst_20 = arith.constant 0.000000e+00 : f32
    %35 = vector.broadcast %cst_20 : f32 to vector<8x64xf32>
    %36 = arith.maximumf %34, %35 : vector<8x64xf32>
    %37 = vector.extract_strided_slice %9 {offsets = [32, 0], sizes = [8, 64], strides = [1, 1]} : vector<64x64xf32> to vector<8x64xf32>
    %cst_21 = arith.constant dense<0.000000e+00> : vector<8x64xf32>
    %38 = tpu.matmul %36, %15, %cst_21 {dimension_numbers = #tpu.dot_dimension_numbers<[1], [0], [0], [1], [0, 0, 1, 1], [], []>} : vector<8x64xf32>, vector<64x64xf32>, vector<8x64xf32> -> vector<8x64xf32>
    %39 = arith.addf %37, %38 : vector<8x64xf32>
    %cst_22 = arith.constant 0.000000e+00 : f32
    %40 = vector.broadcast %cst_22 : f32 to vector<8x64xf32>
    %41 = arith.maximumf %39, %40 : vector<8x64xf32>
    %42 = vector.extract_strided_slice %9 {offsets = [40, 0], sizes = [8, 64], strides = [1, 1]} : vector<64x64xf32> to vector<8x64xf32>
    %cst_23 = arith.constant dense<0.000000e+00> : vector<8x64xf32>
    %43 = tpu.matmul %41, %15, %cst_23 {dimension_numbers = #tpu.dot_dimension_numbers<[1], [0], [0], [1], [0, 0, 1, 1], [], []>} : vector<8x64xf32>, vector<64x64xf32>, vector<8x64xf32> -> vector<8x64xf32>
    %44 = arith.addf %42, %43 : vector<8x64xf32>
    %cst_24 = arith.constant 0.000000e+00 : f32
    %45 = vector.broadcast %cst_24 : f32 to vector<8x64xf32>
    %46 = arith.maximumf %44, %45 : vector<8x64xf32>
    %47 = vector.extract_strided_slice %9 {offsets = [48, 0], sizes = [8, 64], strides = [1, 1]} : vector<64x64xf32> to vector<8x64xf32>
    %cst_25 = arith.constant dense<0.000000e+00> : vector<8x64xf32>
    %48 = tpu.matmul %46, %15, %cst_25 {dimension_numbers = #tpu.dot_dimension_numbers<[1], [0], [0], [1], [0, 0, 1, 1], [], []>} : vector<8x64xf32>, vector<64x64xf32>, vector<8x64xf32> -> vector<8x64xf32>
    %49 = arith.addf %47, %48 : vector<8x64xf32>
    %cst_26 = arith.constant 0.000000e+00 : f32
    %50 = vector.broadcast %cst_26 : f32 to vector<8x64xf32>
    %51 = arith.maximumf %49, %50 : vector<8x64xf32>
    %52 = vector.extract_strided_slice %9 {offsets = [56, 0], sizes = [8, 64], strides = [1, 1]} : vector<64x64xf32> to vector<8x64xf32>
    %cst_27 = arith.constant dense<0.000000e+00> : vector<8x64xf32>
    %53 = tpu.matmul %51, %15, %cst_27 {dimension_numbers = #tpu.dot_dimension_numbers<[1], [0], [0], [1], [0, 0, 1, 1], [], []>} : vector<8x64xf32>, vector<64x64xf32>, vector<8x64xf32> -> vector<8x64xf32>
    %54 = arith.addf %52, %53 : vector<8x64xf32>
    %cst_28 = arith.constant 0.000000e+00 : f32
    %55 = vector.broadcast %cst_28 : f32 to vector<8x64xf32>
    %56 = arith.maximumf %54, %55 : vector<8x64xf32>
    %c0_29 = arith.constant 0 : index
    %c0_30 = arith.constant 0 : index
    %57 = vector.load %arg4[%c0_29, %c0_30] : memref<64x32xf32, #tpu.memory_space<vmem>>, vector<64x32xf32>
    %cst_31 = arith.constant dense<0.000000e+00> : vector<8x32xf32>
    %58 = tpu.matmul %56, %57, %cst_31 {dimension_numbers = #tpu.dot_dimension_numbers<[1], [0], [0], [1], [0, 0, 1, 1], [], []>} : vector<8x64xf32>, vector<64x32xf32>, vector<8x32xf32> -> vector<8x32xf32>
    %59 = arith.addf %58, %14 : vector<8x32xf32>
    %cst_32 = arith.constant 0.000000e+00 : f32
    %60 = vector.broadcast %cst_32 : f32 to vector<8x32xf32>
    %61 = arith.maximumf %59, %60 : vector<8x32xf32>
    %62 = vector.broadcast %3 : vector<1x32xf32> to vector<8x32xf32>
    %63 = arith.mulf %61, %62 : vector<8x32xf32>
    %cst_33 = arith.constant dense<0.000000e+00> : vector<8xf32>
    %64 = vector.multi_reduction <add>, %63, %cst_33 [1] : vector<8x32xf32> to vector<8xf32>
    %65 = vector.shape_cast %64 : vector<8xf32> to vector<8x1xf32>
    %66 = vector.broadcast %4 : vector<1x1xf32> to vector<8x1xf32>
    %67 = arith.addf %65, %66 : vector<8x1xf32>
    %c0_34 = arith.constant 0 : index
    %c0_35 = arith.constant 0 : index
    %68 = vector.load %arg7[%c0_34, %c0_35] : memref<8x1xf32, #tpu.memory_space<vmem>>, vector<8x1xf32>
    tpu.vector_store %arg7[%c0_34, %c0_35], %67 {strides = array<i32>} : memref<8x1xf32, #tpu.memory_space<vmem>>, vector<8x1xf32>,
    return
  }
}

</mosaic_0001>

<llo_original>
// kernel: qnetwork_rnn_forward.1
$region0: #{qnetwork_rnn_forward.1}
  #allocation0 [shape = 'u32[]', space=smem, size = 0x4, offset = 0x4, fixed_abs, tag = 'smem constant byte address 0x4 - core index']
  #allocation1 [shape = 'u32[144,128]{1,0:T(1,128)}', space=vmem, size = 0x12000, scoped, tag = 'internal scratch']
  %s0 = inlined_call_operand.vmem [shape: f32[64,128], index: 0, kind: input, shape index: {}]
  %s1 = inlined_call_operand.vmem [shape: f32[128,64], index: 1, kind: input, shape index: {}]
  %s2 = inlined_call_operand.vmem [shape: f32[64,64], index: 2, kind: input, shape index: {}]
  %s3 = inlined_call_operand.vmem [shape: f32[8,52], index: 3, kind: input, shape index: {}]
  %s4 = inlined_call_operand.vmem [shape: f32[64,32], index: 4, kind: input, shape index: {}]
  %s5 = inlined_call_operand.vmem [shape: f32[52,32], index: 5, kind: input, shape index: {}]
  %s6 = inlined_call_operand.vmem [shape: f32[8,128], index: 6, kind: input, shape index: {}]
  %s7 = inlined_call_operand.vmem [shape: f32[8,1], index: 7, kind: output, shape index: {}]
  %s8 = sld [smem:[#allocation0]]
  $region38: #{qnetwork_rnn_forward.1} parent=0
    _
  %s10 = ssub.s32 1, %s8
  %s11 = scalar_select 0, %s10, %s8
  // Predicated region
  $region2: #{qnetwork_rnn_forward.1} parent=0 // pred_check
    _
  $region3: #{qnetwork_rnn_forward.1} parent=0 // pred_check_branch
    %13 = sbr.rel (0) target = $region5
  $region4: #{qnetwork_rnn_forward.1} parent=0 // pred_region
    _
  $region5: #{qnetwork_rnn_forward.1} parent=0 // pred_fallthru
    _
  // Predicated region
  $region6: #{qnetwork_rnn_forward.1} parent=0 // pred_check
    _
  $region7: #{qnetwork_rnn_forward.1} parent=0 // pred_check_branch
    %15 = sbr.rel (0) target = $region9
  $region8: #{qnetwork_rnn_forward.1} parent=0 // pred_region
    _
  $region9: #{qnetwork_rnn_forward.1} parent=0 // pred_fallthru
    _
  // Predicated region
  $region10: #{qnetwork_rnn_forward.1} parent=0 // pred_check
    _
  $region11: #{qnetwork_rnn_forward.1} parent=0 // pred_check_branch
    %17 = sbr.rel (0) target = $region13
  $region12: #{qnetwork_rnn_forward.1} parent=0 // pred_region
    _
  $region13: #{qnetwork_rnn_forward.1} parent=0 // pred_fallthru
    _
  // Predicated region
  $region14: #{qnetwork_rnn_forward.1} parent=0 // pred_check
    _
  $region15: #{qnetwork_rnn_forward.1} parent=0 // pred_check_branch
    %19 = sbr.rel (0) target = $region17
  $region16: #{qnetwork_rnn_forward.1} parent=0 // pred_region
    _
  $region17: #{qnetwork_rnn_forward.1} parent=0 // pred_fallthru
    _
  // Predicated region
  $region18: #{qnetwork_rnn_forward.1} parent=0 // pred_check
    _
  $region19: #{qnetwork_rnn_forward.1} parent=0 // pred_check_branch
    %21 = sbr.rel (0) target = $region21
  $region20: #{qnetwork_rnn_forward.1} parent=0 // pred_region
    _
  $region21: #{qnetwork_rnn_forward.1} parent=0 // pred_fallthru
    _
  // Predicated region
  $region22: #{qnetwork_rnn_forward.1} parent=0 // pred_check
    _
  $region23: #{qnetwork_rnn_forward.1} parent=0 // pred_check_branch
    %23 = sbr.rel (0) target = $region25
  $region24: #{qnetwork_rnn_forward.1} parent=0 // pred_region
    _
  $region25: #{qnetwork_rnn_forward.1} parent=0 // pred_fallthru
    _
  // Predicated region
  $region26: #{qnetwork_rnn_forward.1} parent=0 // pred_check
    _
  $region27: #{qnetwork_rnn_forward.1} parent=0 // pred_check_branch
    %25 = sbr.rel (0) target = $region29
  $region28: #{qnetwork_rnn_forward.1} parent=0 // pred_region
    _
  $region29: #{qnetwork_rnn_forward.1} parent=0 // pred_fallthru
    _
  %v26 = vld [vmem:[%s6] sm:$0xff]
  %v27 = vld [vmem:[%s0] sm:$0xff]
  %v28 = vld [vmem:[%s0 + $0x8] sm:$0xff]
  %v29 = vld [vmem:[%s0 + $0x10] sm:$0xff]
  %v30 = vld [vmem:[%s0 + $0x18] sm:$0xff]
  %v31 = vld [vmem:[%s0 + $0x20] sm:$0xff]
  %v32 = vld [vmem:[%s0 + $0x28] sm:$0xff]
  %v33 = vld [vmem:[%s0 + $0x30] sm:$0xff]
  %v34 = vld [vmem:[%s0 + $0x38] sm:$0xff]
  %v35 = vld [vmem:[%s1] sm:$0xff]
  %v36 = vld [vmem:[%s1 + $0x8] sm:$0xff]
  %v37 = vld [vmem:[%s1 + $0x10] sm:$0xff]
  %v38 = vld [vmem:[%s1 + $0x18] sm:$0xff]
  %v39 = vld [vmem:[%s1 + $0x20] sm:$0xff]
  %v40 = vld [vmem:[%s1 + $0x28] sm:$0xff]
  %v41 = vld [vmem:[%s1 + $0x30] sm:$0xff]
  %v42 = vld [vmem:[%s1 + $0x38] sm:$0xff]
  %v43 = vld [vmem:[%s1 + $0x40] sm:$0xff]
  %v44 = vld [vmem:[%s1 + $0x48] sm:$0xff]
  %v45 = vld [vmem:[%s1 + $0x50] sm:$0xff]
  %v46 = vld [vmem:[%s1 + $0x58] sm:$0xff]
  %v47 = vld [vmem:[%s1 + $0x60] sm:$0xff]
  %v48 = vld [vmem:[%s1 + $0x68] sm:$0xff]
  %v49 = vld [vmem:[%s1 + $0x70] sm:$0xff]
  %v50 = vld [vmem:[%s1 + $0x78] sm:$0xff]
  %v51 = vlaneseq
  %v52 = vshrl.u32 %v51, 7
  %v53 = vsub.s32 0, %v52
  %v54 = vrot.slane %v26, %v53
  %55 = vmatprep.subr.mxu0 0.0
  %56 = vmatpush1.msra.mxu0 %v50
  %57 = vmatprep.subr.mxu0 0.0
  %58 = vmatpush1.msra.mxu0 %v49
  %59 = vmatprep.subr.mxu0 0.0
  %60 = vmatpush1.msra.mxu0 %v48
  %61 = vmatprep.subr.mxu0 0.0
  %62 = vmatpush1.msra.mxu0 %v47
  %63 = vmatprep.subr.mxu0 0.0
  %64 = vmatpush1.msra.mxu0 %v46
  %65 = vmatprep.subr.mxu0 0.0
  %66 = vmatpush1.msra.mxu0 %v45
  %67 = vmatprep.subr.mxu0 0.0
  %68 = vmatpush1.msra.mxu0 %v44
  %69 = vmatprep.subr.mxu0 0.0
  %70 = vmatpush1.msra.mxu0 %v43
  %71 = vmatprep.subr.mxu0 0.0
  %72 = vmatpush1.msra.mxu0 %v42
  %73 = vmatprep.subr.mxu0 0.0
  %74 = vmatpush1.msra.mxu0 %v41
  %75 = vmatprep.subr.mxu0 0.0
  %76 = vmatpush1.msra.mxu0 %v40
  %77 = vmatprep.subr.mxu0 0.0
  %78 = vmatpush1.msra.mxu0 %v39
  %79 = vmatprep.subr.mxu0 0.0
  %80 = vmatpush1.msra.mxu0 %v38
  %81 = vmatprep.subr.mxu0 0.0
  %82 = vmatpush1.msra.mxu0 %v37
  %83 = vmatprep.subr.mxu0 0.0
  %84 = vmatpush1.msra.mxu0 %v36
  %85 = vmatprep.subr.mxu0 0.0
  %86 = vmatpush1.msra.mxu0 %v35
  %87 = vmatprep.subr.mxu0 0.0
  %88 = vmatpush2.msra.mxu0 0.0
  %89 = vmatprep.subr.mxu0 0.0
  %90 = vmatpush2.msra.mxu0 0.0
  %91 = vmatprep.subr.mxu0 0.0
  %92 = vmatpush2.msra.mxu0 0.0
  %93 = vmatprep.subr.mxu0 0.0
  %94 = vmatpush2.msra.mxu0 0.0
  %95 = vmatprep.subr.mxu0 0.0
  %96 = vmatpush2.msra.mxu0 0.0
  %97 = vmatprep.subr.mxu0 0.0
  %98 = vmatpush2.msra.mxu0 0.0
  %99 = vmatprep.subr.mxu0 0.0
  %100 = vmatpush2.msra.mxu0 0.0
  %101 = vmatprep.subr.mxu0 0.0
  %102 = vmatpush2.msra.mxu0 0.0
  %103 = vmatprep.subr.mxu0 0.0
  %104 = vmatpush2.msra.mxu0 0.0
  %105 = vmatprep.subr.mxu0 0.0
  %106 = vmatpush2.msra.mxu0 0.0
  %107 = vmatprep.subr.mxu0 0.0
  %108 = vmatpush2.msra.mxu0 0.0
  %109 = vmatprep.subr.mxu0 0.0
  %110 = vmatpush2.msra.mxu0 0.0
  %111 = vmatprep.subr.mxu0 0.0
  %112 = vmatpush2.msra.mxu0 0.0
  %113 = vmatprep.subr.mxu0 0.0
  %114 = vmatpush2.msra.mxu0 0.0
  %115 = vmatprep.subr.mxu0 0.0
  %116 = vmatpush2.msra.mxu0 0.0
  %117 = vmatprep.subr.mxu0 0.0
  %118 = vmatpush2.msra.mxu0 0.0
  %119 = vmatprep.mubr.f32.mxu0 0.0
  %120 = vmatmul.mubr.f32.gmra.mxu0 %v27
  %v121 = vpop.f32.mrf.mxu0
  %v122 = vadd.f32 %v54, %v121
  %v123 = vpop.f32.mrf.mxu0
  %124 = vmatprep.mubr.f32.mxu0 0.0
  %125 = vmatmul.mubr.f32.gmra.mxu0 %v28
  %v126 = vpop.f32.mrf.mxu0
  %v127 = vadd.f32 %v54, %v126
  %v128 = vpop.f32.mrf.mxu0
  %129 = vmatprep.mubr.f32.mxu0 0.0
  %130 = vmatmul.mubr.f32.gmra.mxu0 %v29
  %v131 = vpop.f32.mrf.mxu0
  %v132 = vadd.f32 %v54, %v131
  %v133 = vpop.f32.mrf.mxu0
  %134 = vmatprep.mubr.f32.mxu0 0.0
  %135 = vmatmul.mubr.f32.gmra.mxu0 %v30
  %v136 = vpop.f32.mrf.mxu0
  %v137 = vadd.f32 %v54, %v136
  %v138 = vpop.f32.mrf.mxu0
  %139 = vmatprep.mubr.f32.mxu0 0.0
  %140 = vmatmul.mubr.f32.gmra.mxu0 %v31
  %v141 = vpop.f32.mrf.mxu0
  %v142 = vadd.f32 %v54, %v141
  %v143 = vpop.f32.mrf.mxu0
  %144 = vmatprep.mubr.f32.mxu0 0.0
  %145 = vmatmul.mubr.f32.gmra.mxu0 %v32
  %v146 = vpop.f32.mrf.mxu0
  %v147 = vadd.f32 %v54, %v146
  %v148 = vpop.f32.mrf.mxu0
  %149 = vmatprep.mubr.f32.mxu0 0.0
  %150 = vmatmul.mubr.f32.gmra.mxu0 %v33
  %v151 = vpop.f32.mrf.mxu0
  %v152 = vadd.f32 %v54, %v151
  %v153 = vpop.f32.mrf.mxu0
  %154 = vmatprep.mubr.f32.mxu0 0.0
  %155 = vmatmul.mubr.f32.gmra.mxu0 %v34
  %v156 = vpop.f32.mrf.mxu0
  %v157 = vadd.f32 %v54, %v156
  %v158 = vpop.f32.mrf.mxu0
  %159 = vdwg.mxu0
  %v160 = vld [vmem:[%s3] sm:$0xff]
  %v161 = vld [vmem:[%s5] sm:$0xff]
  %v162 = vld [vmem:[%s5 + $0x8] sm:$0xff]
  %v163 = vld [vmem:[%s5 + $0x10] sm:$0xff]
  %v164 = vld [vmem:[%s5 + $0x18] sm:$0xff]
  %v165 = vld [vmem:[%s5 + $0x20] sm:$0xff]
  %v166 = vld [vmem:[%s5 + $0x28] sm:$0xff]
  %v167 = vld [vmem:[%s5 + $0x30] sm:$0xf]
  %v168 = vlaneseq
  %v169 = vshrl.u32 %v168, 7
  %v170 = vsub.s32 1, %v169
  %v171 = vrot.slane %v26, %v170
  %vm172 = vcmask 424960
  %v174 = vsel %vm172, %v160, 0
  %vm176 = vcmask 1043456
  %v178 = vsel %vm176, %v167, 0
  %180 = vmatprep.subr.mxu0 0.0
  %181 = vmatpush1.msra.mxu0 0.0
  %182 = vmatprep.subr.mxu0 0.0
  %183 = vmatpush1.msra.mxu0 0.0
  %184 = vmatprep.subr.mxu0 0.0
  %185 = vmatpush1.msra.mxu0 0.0
  %186 = vmatprep.subr.mxu0 0.0
  %187 = vmatpush1.msra.mxu0 0.0
  %188 = vmatprep.subr.mxu0 0.0
  %189 = vmatpush1.msra.mxu0 0.0
  %190 = vmatprep.subr.mxu0 0.0
  %191 = vmatpush1.msra.mxu0 0.0
  %192 = vmatprep.subr.mxu0 0.0
  %193 = vmatpush1.msra.mxu0 0.0
  %194 = vmatprep.subr.mxu0 0.0
  %195 = vmatpush1.msra.mxu0 0.0
  %196 = vmatprep.subr.mxu0 0.0
  %197 = vmatpush1.msra.mxu0 0.0
  %198 = vmatprep.subr.mxu0 0.0
  %199 = vmatpush1.msra.mxu0 %v178
  %200 = vmatprep.subr.mxu0 0.0
  %201 = vmatpush1.msra.mxu0 %v166
  %202 = vmatprep.subr.mxu0 0.0
  %203 = vmatpush1.msra.mxu0 %v165
  %204 = vmatprep.subr.mxu0 0.0
  %205 = vmatpush1.msra.mxu0 %v164
  %206 = vmatprep.subr.mxu0 0.0
  %207 = vmatpush1.msra.mxu0 %v163
  %208 = vmatprep.subr.mxu0 0.0
  %209 = vmatpush1.msra.mxu0 %v162
  %210 = vmatprep.subr.mxu0 0.0
  %211 = vmatpush1.msra.mxu0 %v161
  %212 = vmatprep.subr.mxu0 0.0
  %213 = vmatpush2.msra.mxu0 0.0
  %214 = vmatprep.subr.mxu0 0.0
  %215 = vmatpush2.msra.mxu0 0.0
  %216 = vmatprep.subr.mxu0 0.0
  %217 = vmatpush2.msra.mxu0 0.0
  %218 = vmatprep.subr.mxu0 0.0
  %219 = vmatpush2.msra.mxu0 0.0
  %220 = vmatprep.subr.mxu0 0.0
  %221 = vmatpush2.msra.mxu0 0.0
  %222 = vmatprep.subr.mxu0 0.0
  %223 = vmatpush2.msra.mxu0 0.0
  %224 = vmatprep.subr.mxu0 0.0
  %225 = vmatpush2.msra.mxu0 0.0
  %226 = vmatprep.subr.mxu0 0.0
  %227 = vmatpush2.msra.mxu0 0.0
  %228 = vmatprep.subr.mxu0 0.0
  %229 = vmatpush2.msra.mxu0 0.0
  %230 = vmatprep.subr.mxu0 0.0
  %231 = vmatpush2.msra.mxu0 0.0
  %232 = vmatprep.subr.mxu0 0.0
  %233 = vmatpush2.msra.mxu0 0.0
  %234 = vmatprep.subr.mxu0 0.0
  %235 = vmatpush2.msra.mxu0 0.0
  %236 = vmatprep.subr.mxu0 0.0
  %237 = vmatpush2.msra.mxu0 0.0
  %238 = vmatprep.subr.mxu0 0.0
  %239 = vmatpush2.msra.mxu0 0.0
  %240 = vmatprep.subr.mxu0 0.0
  %241 = vmatpush2.msra.mxu0 0.0
  %242 = vmatprep.subr.mxu0 0.0
  %243 = vmatpush2.msra.mxu0 0.0
  %244 = vmatprep.mubr.f32.mxu0 0.0
  %245 = vmatmul.mubr.f32.gmra.mxu0 %v174
  %v246 = vpop.f32.mrf.mxu0
  %v247 = vadd.f32 %v171, %v246
  %v248 = vpop.f32.mrf.mxu0
  %249 = vdwg.mxu0
  %v250 = vld [vmem:[%s2] sm:$0xff]
  %v251 = vld [vmem:[%s2 + $0x8] sm:$0xff]
  %v252 = vld [vmem:[%s2 + $0x10] sm:$0xff]
  %v253 = vld [vmem:[%s2 + $0x18] sm:$0xff]
  %v254 = vld [vmem:[%s2 + $0x20] sm:$0xff]
  %v255 = vld [vmem:[%s2 + $0x28] sm:$0xff]
  %v256 = vld [vmem:[%s2 + $0x30] sm:$0xff]
  %v257 = vld [vmem:[%s2 + $0x38] sm:$0xff]
  %vm258 = vcmask 523264
  %v260 = vsel %vm258, 0.0, 0
  %262 = vmatprep.subr.mxu0 0.0
  %263 = vmatpush1.msra.mxu0 0.0
  %264 = vmatprep.subr.mxu0 0.0
  %265 = vmatpush1.msra.mxu0 0.0
  %266 = vmatprep.subr.mxu0 0.0
  %267 = vmatpush1.msra.mxu0 0.0
  %268 = vmatprep.subr.mxu0 0.0
  %269 = vmatpush1.msra.mxu0 0.0
  %270 = vmatprep.subr.mxu0 0.0
  %271 = vmatpush1.msra.mxu0 0.0
  %272 = vmatprep.subr.mxu0 0.0
  %273 = vmatpush1.msra.mxu0 0.0
  %274 = vmatprep.subr.mxu0 0.0
  %275 = vmatpush1.msra.mxu0 0.0
  %276 = vmatprep.subr.mxu0 0.0
  %277 = vmatpush1.msra.mxu0 0.0
  %278 = vmatprep.subr.mxu0 0.0
  %279 = vmatpush1.msra.mxu0 %v257
  %280 = vmatprep.subr.mxu0 0.0
  %281 = vmatpush1.msra.mxu0 %v256
  %282 = vmatprep.subr.mxu0 0.0
  %283 = vmatpush1.msra.mxu0 %v255
  %284 = vmatprep.subr.mxu0 0.0
  %285 = vmatpush1.msra.mxu0 %v254
  %286 = vmatprep.subr.mxu0 0.0
  %287 = vmatpush1.msra.mxu0 %v253
  %288 = vmatprep.subr.mxu0 0.0
  %289 = vmatpush1.msra.mxu0 %v252
  %290 = vmatprep.subr.mxu0 0.0
  %291 = vmatpush1.msra.mxu0 %v251
  %292 = vmatprep.subr.mxu0 0.0
  %293 = vmatpush1.msra.mxu0 %v250
  %294 = vmatprep.subr.mxu0 0.0
  %295 = vmatpush2.msra.mxu0 0.0
  %296 = vmatprep.subr.mxu0 0.0
  %297 = vmatpush2.msra.mxu0 0.0
  %298 = vmatprep.subr.mxu0 0.0
  %299 = vmatpush2.msra.mxu0 0.0
  %300 = vmatprep.subr.mxu0 0.0
  %301 = vmatpush2.msra.mxu0 0.0
  %302 = vmatprep.subr.mxu0 0.0
  %303 = vmatpush2.msra.mxu0 0.0
  %304 = vmatprep.subr.mxu0 0.0
  %305 = vmatpush2.msra.mxu0 0.0
  %306 = vmatprep.subr.mxu0 0.0
  %307 = vmatpush2.msra.mxu0 0.0
  %308 = vmatprep.subr.mxu0 0.0
  %309 = vmatpush2.msra.mxu0 0.0
  %310 = vmatprep.subr.mxu0 0.0
  %311 = vmatpush2.msra.mxu0 0.0
  %312 = vmatprep.subr.mxu0 0.0
  %313 = vmatpush2.msra.mxu0 0.0
  %314 = vmatprep.subr.mxu0 0.0
  %315 = vmatpush2.msra.mxu0 0.0
  %316 = vmatprep.subr.mxu0 0.0
  %317 = vmatpush2.msra.mxu0 0.0
  %318 = vmatprep.subr.mxu0 0.0
  %319 = vmatpush2.msra.mxu0 0.0
  %320 = vmatprep.subr.mxu0 0.0
  %321 = vmatpush2.msra.mxu0 0.0
  %322 = vmatprep.subr.mxu0 0.0
  %323 = vmatpush2.msra.mxu0 0.0
  %324 = vmatprep.subr.mxu0 0.0
  %325 = vmatpush2.msra.mxu0 0.0
  %326 = vmatprep.mubr.f32.mxu0 0.0
  %327 = vmatmul.mubr.f32.gmra.mxu0 %v260
  %v328 = vpop.f32.mrf.mxu0
  %v329 = vadd.f32 0.0, %v328
  %v330 = vpop.f32.mrf.mxu0
  %331 = vdwg.mxu0
  %v332 = vadd.f32 %v122, %v329
  %v333 = vmax.f32 %v332, 0.0
  %v335 = vsel %vm258, %v333, 0
  %337 = vmatprep.subr.mxu0 0.0
  %338 = vmatpush1.msra.mxu0 0.0
  %339 = vmatprep.subr.mxu0 0.0
  %340 = vmatpush1.msra.mxu0 0.0
  %341 = vmatprep.subr.mxu0 0.0
  %342 = vmatpush1.msra.mxu0 0.0
  %343 = vmatprep.subr.mxu0 0.0
  %344 = vmatpush1.msra.mxu0 0.0
  %345 = vmatprep.subr.mxu0 0.0
  %346 = vmatpush1.msra.mxu0 0.0
  %347 = vmatprep.subr.mxu0 0.0
  %348 = vmatpush1.msra.mxu0 0.0
  %349 = vmatprep.subr.mxu0 0.0
  %350 = vmatpush1.msra.mxu0 0.0
  %351 = vmatprep.subr.mxu0 0.0
  %352 = vmatpush1.msra.mxu0 0.0
  %353 = vmatprep.subr.mxu0 0.0
  %354 = vmatpush1.msra.mxu0 %v257
  %355 = vmatprep.subr.mxu0 0.0
  %356 = vmatpush1.msra.mxu0 %v256
  %357 = vmatprep.subr.mxu0 0.0
  %358 = vmatpush1.msra.mxu0 %v255
  %359 = vmatprep.subr.mxu0 0.0
  %360 = vmatpush1.msra.mxu0 %v254
  %361 = vmatprep.subr.mxu0 0.0
  %362 = vmatpush1.msra.mxu0 %v253
  %363 = vmatprep.subr.mxu0 0.0
  %364 = vmatpush1.msra.mxu0 %v252
  %365 = vmatprep.subr.mxu0 0.0
  %366 = vmatpush1.msra.mxu0 %v251
  %367 = vmatprep.subr.mxu0 0.0
  %368 = vmatpush1.msra.mxu0 %v250
  %369 = vmatprep.subr.mxu0 0.0
  %370 = vmatpush2.msra.mxu0 0.0
  %371 = vmatprep.subr.mxu0 0.0
  %372 = vmatpush2.msra.mxu0 0.0
  %373 = vmatprep.subr.mxu0 0.0
  %374 = vmatpush2.msra.mxu0 0.0
  %375 = vmatprep.subr.mxu0 0.0
  %376 = vmatpush2.msra.mxu0 0.0
  %377 = vmatprep.subr.mxu0 0.0
  %378 = vmatpush2.msra.mxu0 0.0
  %379 = vmatprep.subr.mxu0 0.0
  %380 = vmatpush2.msra.mxu0 0.0
  %381 = vmatprep.subr.mxu0 0.0
  %382 = vmatpush2.msra.mxu0 0.0
  %383 = vmatprep.subr.mxu0 0.0
  %384 = vmatpush2.msra.mxu0 0.0
  %385 = vmatprep.subr.mxu0 0.0
  %386 = vmatpush2.msra.mxu0 0.0
  %387 = vmatprep.subr.mxu0 0.0
  %388 = vmatpush2.msra.mxu0 0.0
  %389 = vmatprep.subr.mxu0 0.0
  %390 = vmatpush2.msra.mxu0 0.0
  %391 = vmatprep.subr.mxu0 0.0
  %392 = vmatpush2.msra.mxu0 0.0
  %393 = vmatprep.subr.mxu0 0.0
  %394 = vmatpush2.msra.mxu0 0.0
  %395 = vmatprep.subr.mxu0 0.0
  %396 = vmatpush2.msra.mxu0 0.0
  %397 = vmatprep.subr.mxu0 0.0
  %398 = vmatpush2.msra.mxu0 0.0
  %399 = vmatprep.subr.mxu0 0.0
  %400 = vmatpush2.msra.mxu0 0.0
  %401 = vmatprep.mubr.f32.mxu0 0.0
  %402 = vmatmul.mubr.f32.gmra.mxu0 %v335
  %v403 = vpop.f32.mrf.mxu0
  %v404 = vadd.f32 0.0, %v403
  %v405 = vpop.f32.mrf.mxu0
  %406 = vdwg.mxu0
  %v407 = vadd.f32 %v127, %v404
  %v408 = vmax.f32 %v407, 0.0
  %v410 = vsel %vm258, %v408, 0
  %412 = vmatprep.subr.mxu0 0.0
  %413 = vmatpush1.msra.mxu0 0.0
  %414 = vmatprep.subr.mxu0 0.0
  %415 = vmatpush1.msra.mxu0 0.0
  %416 = vmatprep.subr.mxu0 0.0
  %417 = vmatpush1.msra.mxu0 0.0
  %418 = vmatprep.subr.mxu0 0.0
  %419 = vmatpush1.msra.mxu0 0.0
  %420 = vmatprep.subr.mxu0 0.0
  %421 = vmatpush1.msra.mxu0 0.0
  %422 = vmatprep.subr.mxu0 0.0
  %423 = vmatpush1.msra.mxu0 0.0
  %424 = vmatprep.subr.mxu0 0.0
  %425 = vmatpush1.msra.mxu0 0.0
  %426 = vmatprep.subr.mxu0 0.0
  %427 = vmatpush1.msra.mxu0 0.0
  %428 = vmatprep.subr.mxu0 0.0
  %429 = vmatpush1.msra.mxu0 %v257
  %430 = vmatprep.subr.mxu0 0.0
  %431 = vmatpush1.msra.mxu0 %v256
  %432 = vmatprep.subr.mxu0 0.0
  %433 = vmatpush1.msra.mxu0 %v255
  %434 = vmatprep.subr.mxu0 0.0
  %435 = vmatpush1.msra.mxu0 %v254
  %436 = vmatprep.subr.mxu0 0.0
  %437 = vmatpush1.msra.mxu0 %v253
  %438 = vmatprep.subr.mxu0 0.0
  %439 = vmatpush1.msra.mxu0 %v252
  %440 = vmatprep.subr.mxu0 0.0
  %441 = vmatpush1.msra.mxu0 %v251
  %442 = vmatprep.subr.mxu0 0.0
  %443 = vmatpush1.msra.mxu0 %v250
  %444 = vmatprep.subr.mxu0 0.0
  %445 = vmatpush2.msra.mxu0 0.0
  %446 = vmatprep.subr.mxu0 0.0
  %447 = vmatpush2.msra.mxu0 0.0
  %448 = vmatprep.subr.mxu0 0.0
  %449 = vmatpush2.msra.mxu0 0.0
  %450 = vmatprep.subr.mxu0 0.0
  %451 = vmatpush2.msra.mxu0 0.0
  %452 = vmatprep.subr.mxu0 0.0
  %453 = vmatpush2.msra.mxu0 0.0
  %454 = vmatprep.subr.mxu0 0.0
  %455 = vmatpush2.msra.mxu0 0.0
  %456 = vmatprep.subr.mxu0 0.0
  %457 = vmatpush2.msra.mxu0 0.0
  %458 = vmatprep.subr.mxu0 0.0
  %459 = vmatpush2.msra.mxu0 0.0
  %460 = vmatprep.subr.mxu0 0.0
  %461 = vmatpush2.msra.mxu0 0.0
  %462 = vmatprep.subr.mxu0 0.0
  %463 = vmatpush2.msra.mxu0 0.0
  %464 = vmatprep.subr.mxu0 0.0
  %465 = vmatpush2.msra.mxu0 0.0
  %466 = vmatprep.subr.mxu0 0.0
  %467 = vmatpush2.msra.mxu0 0.0
  %468 = vmatprep.subr.mxu0 0.0
  %469 = vmatpush2.msra.mxu0 0.0
  %470 = vmatprep.subr.mxu0 0.0
  %471 = vmatpush2.msra.mxu0 0.0
  %472 = vmatprep.subr.mxu0 0.0
  %473 = vmatpush2.msra.mxu0 0.0
  %474 = vmatprep.subr.mxu0 0.0
  %475 = vmatpush2.msra.mxu0 0.0
  %476 = vmatprep.mubr.f32.mxu0 0.0
  %477 = vmatmul.mubr.f32.gmra.mxu0 %v410
  %v478 = vpop.f32.mrf.mxu0
  %v479 = vadd.f32 0.0, %v478
  %v480 = vpop.f32.mrf.mxu0
  %481 = vdwg.mxu0
  %v482 = vadd.f32 %v132, %v479
  %v483 = vmax.f32 %v482, 0.0
  %v485 = vsel %vm258, %v483, 0
  %487 = vmatprep.subr.mxu0 0.0
  %488 = vmatpush1.msra.mxu0 0.0
  %489 = vmatprep.subr.mxu0 0.0
  %490 = vmatpush1.msra.mxu0 0.0
  %491 = vmatprep.subr.mxu0 0.0
  %492 = vmatpush1.msra.mxu0 0.0
  %493 = vmatprep.subr.mxu0 0.0
  %494 = vmatpush1.msra.mxu0 0.0
  %495 = vmatprep.subr.mxu0 0.0
  %496 = vmatpush1.msra.mxu0 0.0
  %497 = vmatprep.subr.mxu0 0.0
  %498 = vmatpush1.msra.mxu0 0.0
  %499 = vmatprep.subr.mxu0 0.0
  %500 = vmatpush1.msra.mxu0 0.0
  %501 = vmatprep.subr.mxu0 0.0
  %502 = vmatpush1.msra.mxu0 0.0
  %503 = vmatprep.subr.mxu0 0.0
  %504 = vmatpush1.msra.mxu0 %v257
  %505 = vmatprep.subr.mxu0 0.0
  %506 = vmatpush1.msra.mxu0 %v256
  %507 = vmatprep.subr.mxu0 0.0
  %508 = vmatpush1.msra.mxu0 %v255
  %509 = vmatprep.subr.mxu0 0.0
  %510 = vmatpush1.msra.mxu0 %v254
  %511 = vmatprep.subr.mxu0 0.0
  %512 = vmatpush1.msra.mxu0 %v253
  %513 = vmatprep.subr.mxu0 0.0
  %514 = vmatpush1.msra.mxu0 %v252
  %515 = vmatprep.subr.mxu0 0.0
  %516 = vmatpush1.msra.mxu0 %v251
  %517 = vmatprep.subr.mxu0 0.0
  %518 = vmatpush1.msra.mxu0 %v250
  %519 = vmatprep.subr.mxu0 0.0
  %520 = vmatpush2.msra.mxu0 0.0
  %521 = vmatprep.subr.mxu0 0.0
  %522 = vmatpush2.msra.mxu0 0.0
  %523 = vmatprep.subr.mxu0 0.0
  %524 = vmatpush2.msra.mxu0 0.0
  %525 = vmatprep.subr.mxu0 0.0
  %526 = vmatpush2.msra.mxu0 0.0
  %527 = vmatprep.subr.mxu0 0.0
  %528 = vmatpush2.msra.mxu0 0.0
  %529 = vmatprep.subr.mxu0 0.0
  %530 = vmatpush2.msra.mxu0 0.0
  %531 = vmatprep.subr.mxu0 0.0
  %532 = vmatpush2.msra.mxu0 0.0
  %533 = vmatprep.subr.mxu0 0.0
  %534 = vmatpush2.msra.mxu0 0.0
  %535 = vmatprep.subr.mxu0 0.0
  %536 = vmatpush2.msra.mxu0 0.0
  %537 = vmatprep.subr.mxu0 0.0
  %538 = vmatpush2.msra.mxu0 0.0
  %539 = vmatprep.subr.mxu0 0.0
  %540 = vmatpush2.msra.mxu0 0.0
  %541 = vmatprep.subr.mxu0 0.0
  %542 = vmatpush2.msra.mxu0 0.0
  %543 = vmatprep.subr.mxu0 0.0
  %544 = vmatpush2.msra.mxu0 0.0
  %545 = vmatprep.subr.mxu0 0.0
  %546 = vmatpush2.msra.mxu0 0.0
  %547 = vmatprep.subr.mxu0 0.0
  %548 = vmatpush2.msra.mxu0 0.0
  %549 = vmatprep.subr.mxu0 0.0
  %550 = vmatpush2.msra.mxu0 0.0
  %551 = vmatprep.mubr.f32.mxu0 0.0
  %552 = vmatmul.mubr.f32.gmra.mxu0 %v485
  %v553 = vpop.f32.mrf.mxu0
  %v554 = vadd.f32 0.0, %v553
  %v555 = vpop.f32.mrf.mxu0
  %556 = vdwg.mxu0
  %v557 = vadd.f32 %v137, %v554
  %v558 = vmax.f32 %v557, 0.0
  %v560 = vsel %vm258, %v558, 0
  %562 = vmatprep.subr.mxu0 0.0
  %563 = vmatpush1.msra.mxu0 0.0
  %564 = vmatprep.subr.mxu0 0.0
  %565 = vmatpush1.msra.mxu0 0.0
  %566 = vmatprep.subr.mxu0 0.0
  %567 = vmatpush1.msra.mxu0 0.0
  %568 = vmatprep.subr.mxu0 0.0
  %569 = vmatpush1.msra.mxu0 0.0
  %570 = vmatprep.subr.mxu0 0.0
  %571 = vmatpush1.msra.mxu0 0.0
  %572 = vmatprep.subr.mxu0 0.0
  %573 = vmatpush1.msra.mxu0 0.0
  %574 = vmatprep.subr.mxu0 0.0
  %575 = vmatpush1.msra.mxu0 0.0
  %576 = vmatprep.subr.mxu0 0.0
  %577 = vmatpush1.msra.mxu0 0.0
  %578 = vmatprep.subr.mxu0 0.0
  %579 = vmatpush1.msra.mxu0 %v257
  %580 = vmatprep.subr.mxu0 0.0
  %581 = vmatpush1.msra.mxu0 %v256
  %582 = vmatprep.subr.mxu0 0.0
  %583 = vmatpush1.msra.mxu0 %v255
  %584 = vmatprep.subr.mxu0 0.0
  %585 = vmatpush1.msra.mxu0 %v254
  %586 = vmatprep.subr.mxu0 0.0
  %587 = vmatpush1.msra.mxu0 %v253
  %588 = vmatprep.subr.mxu0 0.0
  %589 = vmatpush1.msra.mxu0 %v252
  %590 = vmatprep.subr.mxu0 0.0
  %591 = vmatpush1.msra.mxu0 %v251
  %592 = vmatprep.subr.mxu0 0.0
  %593 = vmatpush1.msra.mxu0 %v250
  %594 = vmatprep.subr.mxu0 0.0
  %595 = vmatpush2.msra.mxu0 0.0
  %596 = vmatprep.subr.mxu0 0.0
  %597 = vmatpush2.msra.mxu0 0.0
  %598 = vmatprep.subr.mxu0 0.0
  %599 = vmatpush2.msra.mxu0 0.0
  %600 = vmatprep.subr.mxu0 0.0
  %601 = vmatpush2.msra.mxu0 0.0
  %602 = vmatprep.subr.mxu0 0.0
  %603 = vmatpush2.msra.mxu0 0.0
  %604 = vmatprep.subr.mxu0 0.0
  %605 = vmatpush2.msra.mxu0 0.0
  %606 = vmatprep.subr.mxu0 0.0
  %607 = vmatpush2.msra.mxu0 0.0
  %608 = vmatprep.subr.mxu0 0.0
  %609 = vmatpush2.msra.mxu0 0.0
  %610 = vmatprep.subr.mxu0 0.0
  %611 = vmatpush2.msra.mxu0 0.0
  %612 = vmatprep.subr.mxu0 0.0
  %613 = vmatpush2.msra.mxu0 0.0
  %614 = vmatprep.subr.mxu0 0.0
  %615 = vmatpush2.msra.mxu0 0.0
  %616 = vmatprep.subr.mxu0 0.0
  %617 = vmatpush2.msra.mxu0 0.0
  %618 = vmatprep.subr.mxu0 0.0
  %619 = vmatpush2.msra.mxu0 0.0
  %620 = vmatprep.subr.mxu0 0.0
  %621 = vmatpush2.msra.mxu0 0.0
  %622 = vmatprep.subr.mxu0 0.0
  %623 = vmatpush2.msra.mxu0 0.0
  %624 = vmatprep.subr.mxu0 0.0
  %625 = vmatpush2.msra.mxu0 0.0
  %626 = vmatprep.mubr.f32.mxu0 0.0
  %627 = vmatmul.mubr.f32.gmra.mxu0 %v560
  %v628 = vpop.f32.mrf.mxu0
  %v629 = vadd.f32 0.0, %v628
  %v630 = vpop.f32.mrf.mxu0
  %631 = vdwg.mxu0
  %v632 = vadd.f32 %v142, %v629
  %v633 = vmax.f32 %v632, 0.0
  %v635 = vsel %vm258, %v633, 0
  %637 = vmatprep.subr.mxu0 0.0
  %638 = vmatpush1.msra.mxu0 0.0
  %639 = vmatprep.subr.mxu0 0.0
  %640 = vmatpush1.msra.mxu0 0.0
  %641 = vmatprep.subr.mxu0 0.0
  %642 = vmatpush1.msra.mxu0 0.0
  %643 = vmatprep.subr.mxu0 0.0
  %644 = vmatpush1.msra.mxu0 0.0
  %645 = vmatprep.subr.mxu0 0.0
  %646 = vmatpush1.msra.mxu0 0.0
  %647 = vmatprep.subr.mxu0 0.0
  %648 = vmatpush1.msra.mxu0 0.0
  %649 = vmatprep.subr.mxu0 0.0
  %650 = vmatpush1.msra.mxu0 0.0
  %651 = vmatprep.subr.mxu0 0.0
  %652 = vmatpush1.msra.mxu0 0.0
  %653 = vmatprep.subr.mxu0 0.0
  %654 = vmatpush1.msra.mxu0 %v257
  %655 = vmatprep.subr.mxu0 0.0
  %656 = vmatpush1.msra.mxu0 %v256
  %657 = vmatprep.subr.mxu0 0.0
  %658 = vmatpush1.msra.mxu0 %v255
  %659 = vmatprep.subr.mxu0 0.0
  %660 = vmatpush1.msra.mxu0 %v254
  %661 = vmatprep.subr.mxu0 0.0
  %662 = vmatpush1.msra.mxu0 %v253
  %663 = vmatprep.subr.mxu0 0.0
  %664 = vmatpush1.msra.mxu0 %v252
  %665 = vmatprep.subr.mxu0 0.0
  %666 = vmatpush1.msra.mxu0 %v251
  %667 = vmatprep.subr.mxu0 0.0
  %668 = vmatpush1.msra.mxu0 %v250
  %669 = vmatprep.subr.mxu0 0.0
  %670 = vmatpush2.msra.mxu0 0.0
  %671 = vmatprep.subr.mxu0 0.0
  %672 = vmatpush2.msra.mxu0 0.0
  %673 = vmatprep.subr.mxu0 0.0
  %674 = vmatpush2.msra.mxu0 0.0
  %675 = vmatprep.subr.mxu0 0.0
  %676 = vmatpush2.msra.mxu0 0.0
  %677 = vmatprep.subr.mxu0 0.0
  %678 = vmatpush2.msra.mxu0 0.0
  %679 = vmatprep.subr.mxu0 0.0
  %680 = vmatpush2.msra.mxu0 0.0
  %681 = vmatprep.subr.mxu0 0.0
  %682 = vmatpush2.msra.mxu0 0.0
  %683 = vmatprep.subr.mxu0 0.0
  %684 = vmatpush2.msra.mxu0 0.0
  %685 = vmatprep.subr.mxu0 0.0
  %686 = vmatpush2.msra.mxu0 0.0
  %687 = vmatprep.subr.mxu0 0.0
  %688 = vmatpush2.msra.mxu0 0.0
  %689 = vmatprep.subr.mxu0 0.0
  %690 = vmatpush2.msra.mxu0 0.0
  %691 = vmatprep.subr.mxu0 0.0
  %692 = vmatpush2.msra.mxu0 0.0
  %693 = vmatprep.subr.mxu0 0.0
  %694 = vmatpush2.msra.mxu0 0.0
  %695 = vmatprep.subr.mxu0 0.0
  %696 = vmatpush2.msra.mxu0 0.0
  %697 = vmatprep.subr.mxu0 0.0
  %698 = vmatpush2.msra.mxu0 0.0
  %699 = vmatprep.subr.mxu0 0.0
  %700 = vmatpush2.msra.mxu0 0.0
  %701 = vmatprep.mubr.f32.mxu0 0.0
  %702 = vmatmul.mubr.f32.gmra.mxu0 %v635
  %v703 = vpop.f32.mrf.mxu0
  %v704 = vadd.f32 0.0, %v703
  %v705 = vpop.f32.mrf.mxu0
  %706 = vdwg.mxu0
  %v707 = vadd.f32 %v147, %v704
  %v708 = vmax.f32 %v707, 0.0
  %v710 = vsel %vm258, %v708, 0
  %712 = vmatprep.subr.mxu0 0.0
  %713 = vmatpush1.msra.mxu0 0.0
  %714 = vmatprep.subr.mxu0 0.0
  %715 = vmatpush1.msra.mxu0 0.0
  %716 = vmatprep.subr.mxu0 0.0
  %717 = vmatpush1.msra.mxu0 0.0
  %718 = vmatprep.subr.mxu0 0.0
  %719 = vmatpush1.msra.mxu0 0.0
  %720 = vmatprep.subr.mxu0 0.0
  %721 = vmatpush1.msra.mxu0 0.0
  %722 = vmatprep.subr.mxu0 0.0
  %723 = vmatpush1.msra.mxu0 0.0
  %724 = vmatprep.subr.mxu0 0.0
  %725 = vmatpush1.msra.mxu0 0.0
  %726 = vmatprep.subr.mxu0 0.0
  %727 = vmatpush1.msra.mxu0 0.0
  %728 = vmatprep.subr.mxu0 0.0
  %729 = vmatpush1.msra.mxu0 %v257
  %730 = vmatprep.subr.mxu0 0.0
  %731 = vmatpush1.msra.mxu0 %v256
  %732 = vmatprep.subr.mxu0 0.0
  %733 = vmatpush1.msra.mxu0 %v255
  %734 = vmatprep.subr.mxu0 0.0
  %735 = vmatpush1.msra.mxu0 %v254
  %736 = vmatprep.subr.mxu0 0.0
  %737 = vmatpush1.msra.mxu0 %v253
  %738 = vmatprep.subr.mxu0 0.0
  %739 = vmatpush1.msra.mxu0 %v252
  %740 = vmatprep.subr.mxu0 0.0
  %741 = vmatpush1.msra.mxu0 %v251
  %742 = vmatprep.subr.mxu0 0.0
  %743 = vmatpush1.msra.mxu0 %v250
  %744 = vmatprep.subr.mxu0 0.0
  %745 = vmatpush2.msra.mxu0 0.0
  %746 = vmatprep.subr.mxu0 0.0
  %747 = vmatpush2.msra.mxu0 0.0
  %748 = vmatprep.subr.mxu0 0.0
  %749 = vmatpush2.msra.mxu0 0.0
  %750 = vmatprep.subr.mxu0 0.0
  %751 = vmatpush2.msra.mxu0 0.0
  %752 = vmatprep.subr.mxu0 0.0
  %753 = vmatpush2.msra.mxu0 0.0
  %754 = vmatprep.subr.mxu0 0.0
  %755 = vmatpush2.msra.mxu0 0.0
  %756 = vmatprep.subr.mxu0 0.0
  %757 = vmatpush2.msra.mxu0 0.0
  %758 = vmatprep.subr.mxu0 0.0
  %759 = vmatpush2.msra.mxu0 0.0
  %760 = vmatprep.subr.mxu0 0.0
  %761 = vmatpush2.msra.mxu0 0.0
  %762 = vmatprep.subr.mxu0 0.0
  %763 = vmatpush2.msra.mxu0 0.0
  %764 = vmatprep.subr.mxu0 0.0
  %765 = vmatpush2.msra.mxu0 0.0
  %766 = vmatprep.subr.mxu0 0.0
  %767 = vmatpush2.msra.mxu0 0.0
  %768 = vmatprep.subr.mxu0 0.0
  %769 = vmatpush2.msra.mxu0 0.0
  %770 = vmatprep.subr.mxu0 0.0
  %771 = vmatpush2.msra.mxu0 0.0
  %772 = vmatprep.subr.mxu0 0.0
  %773 = vmatpush2.msra.mxu0 0.0
  %774 = vmatprep.subr.mxu0 0.0
  %775 = vmatpush2.msra.mxu0 0.0
  %776 = vmatprep.mubr.f32.mxu0 0.0
  %777 = vmatmul.mubr.f32.gmra.mxu0 %v710
  %v778 = vpop.f32.mrf.mxu0
  %v779 = vadd.f32 0.0, %v778
  %v780 = vpop.f32.mrf.mxu0
  %781 = vdwg.mxu0
  %v782 = vadd.f32 %v152, %v779
  %v783 = vmax.f32 %v782, 0.0
  %v785 = vsel %vm258, %v783, 0
  %787 = vmatprep.subr.mxu0 0.0
  %788 = vmatpush1.msra.mxu0 0.0
  %789 = vmatprep.subr.mxu0 0.0
  %790 = vmatpush1.msra.mxu0 0.0
  %791 = vmatprep.subr.mxu0 0.0
  %792 = vmatpush1.msra.mxu0 0.0
  %793 = vmatprep.subr.mxu0 0.0
  %794 = vmatpush1.msra.mxu0 0.0
  %795 = vmatprep.subr.mxu0 0.0
  %796 = vmatpush1.msra.mxu0 0.0
  %797 = vmatprep.subr.mxu0 0.0
  %798 = vmatpush1.msra.mxu0 0.0
  %799 = vmatprep.subr.mxu0 0.0
  %800 = vmatpush1.msra.mxu0 0.0
  %801 = vmatprep.subr.mxu0 0.0
  %802 = vmatpush1.msra.mxu0 0.0
  %803 = vmatprep.subr.mxu0 0.0
  %804 = vmatpush1.msra.mxu0 %v257
  %805 = vmatprep.subr.mxu0 0.0
  %806 = vmatpush1.msra.mxu0 %v256
  %807 = vmatprep.subr.mxu0 0.0
  %808 = vmatpush1.msra.mxu0 %v255
  %809 = vmatprep.subr.mxu0 0.0
  %810 = vmatpush1.msra.mxu0 %v254
  %811 = vmatprep.subr.mxu0 0.0
  %812 = vmatpush1.msra.mxu0 %v253
  %813 = vmatprep.subr.mxu0 0.0
  %814 = vmatpush1.msra.mxu0 %v252
  %815 = vmatprep.subr.mxu0 0.0
  %816 = vmatpush1.msra.mxu0 %v251
  %817 = vmatprep.subr.mxu0 0.0
  %818 = vmatpush1.msra.mxu0 %v250
  %819 = vmatprep.subr.mxu0 0.0
  %820 = vmatpush2.msra.mxu0 0.0
  %821 = vmatprep.subr.mxu0 0.0
  %822 = vmatpush2.msra.mxu0 0.0
  %823 = vmatprep.subr.mxu0 0.0
  %824 = vmatpush2.msra.mxu0 0.0
  %825 = vmatprep.subr.mxu0 0.0
  %826 = vmatpush2.msra.mxu0 0.0
  %827 = vmatprep.subr.mxu0 0.0
  %828 = vmatpush2.msra.mxu0 0.0
  %829 = vmatprep.subr.mxu0 0.0
  %830 = vmatpush2.msra.mxu0 0.0
  %831 = vmatprep.subr.mxu0 0.0
  %832 = vmatpush2.msra.mxu0 0.0
  %833 = vmatprep.subr.mxu0 0.0
  %834 = vmatpush2.msra.mxu0 0.0
  %835 = vmatprep.subr.mxu0 0.0
  %836 = vmatpush2.msra.mxu0 0.0
  %837 = vmatprep.subr.mxu0 0.0
  %838 = vmatpush2.msra.mxu0 0.0
  %839 = vmatprep.subr.mxu0 0.0
  %840 = vmatpush2.msra.mxu0 0.0
  %841 = vmatprep.subr.mxu0 0.0
  %842 = vmatpush2.msra.mxu0 0.0
  %843 = vmatprep.subr.mxu0 0.0
  %844 = vmatpush2.msra.mxu0 0.0
  %845 = vmatprep.subr.mxu0 0.0
  %846 = vmatpush2.msra.mxu0 0.0
  %847 = vmatprep.subr.mxu0 0.0
  %848 = vmatpush2.msra.mxu0 0.0
  %849 = vmatprep.subr.mxu0 0.0
  %850 = vmatpush2.msra.mxu0 0.0
  %851 = vmatprep.mubr.f32.mxu0 0.0
  %852 = vmatmul.mubr.f32.gmra.mxu0 %v785
  %v853 = vpop.f32.mrf.mxu0
  %v854 = vadd.f32 0.0, %v853
  %v855 = vpop.f32.mrf.mxu0
  %856 = vdwg.mxu0
  %v857 = vadd.f32 %v157, %v854
  %v858 = vmax.f32 %v857, 0.0
  %v859 = vld [vmem:[%s4] sm:$0xff]
  %v860 = vld [vmem:[%s4 + $0x8] sm:$0xff]
  %v861 = vld [vmem:[%s4 + $0x10] sm:$0xff]
  %v862 = vld [vmem:[%s4 + $0x18] sm:$0xff]
  %v863 = vld [vmem:[%s4 + $0x20] sm:$0xff]
  %v864 = vld [vmem:[%s4 + $0x28] sm:$0xff]
  %v865 = vld [vmem:[%s4 + $0x30] sm:$0xff]
  %v866 = vld [vmem:[%s4 + $0x38] sm:$0xff]
  %v868 = vsel %vm258, %v858, 0
  %870 = vmatprep.subr.mxu0 0.0
  %871 = vmatpush1.msra.mxu0 0.0
  %872 = vmatprep.subr.mxu0 0.0
  %873 = vmatpush1.msra.mxu0 0.0
  %874 = vmatprep.subr.mxu0 0.0
  %875 = vmatpush1.msra.mxu0 0.0
  %876 = vmatprep.subr.mxu0 0.0
  %877 = vmatpush1.msra.mxu0 0.0
  %878 = vmatprep.subr.mxu0 0.0
  %879 = vmatpush1.msra.mxu0 0.0
  %880 = vmatprep.subr.mxu0 0.0
  %881 = vmatpush1.msra.mxu0 0.0
  %882 = vmatprep.subr.mxu0 0.0
  %883 = vmatpush1.msra.mxu0 0.0
  %884 = vmatprep.subr.mxu0 0.0
  %885 = vmatpush1.msra.mxu0 0.0
  %886 = vmatprep.subr.mxu0 0.0
  %887 = vmatpush1.msra.mxu0 %v866
  %888 = vmatprep.subr.mxu0 0.0
  %889 = vmatpush1.msra.mxu0 %v865
  %890 = vmatprep.subr.mxu0 0.0
  %891 = vmatpush1.msra.mxu0 %v864
  %892 = vmatprep.subr.mxu0 0.0
  %893 = vmatpush1.msra.mxu0 %v863
  %894 = vmatprep.subr.mxu0 0.0
  %895 = vmatpush1.msra.mxu0 %v862
  %896 = vmatprep.subr.mxu0 0.0
  %897 = vmatpush1.msra.mxu0 %v861
  %898 = vmatprep.subr.mxu0 0.0
  %899 = vmatpush1.msra.mxu0 %v860
  %900 = vmatprep.subr.mxu0 0.0
  %901 = vmatpush1.msra.mxu0 %v859
  %902 = vmatprep.subr.mxu0 0.0
  %903 = vmatpush2.msra.mxu0 0.0
  %904 = vmatprep.subr.mxu0 0.0
  %905 = vmatpush2.msra.mxu0 0.0
  %906 = vmatprep.subr.mxu0 0.0
  %907 = vmatpush2.msra.mxu0 0.0
  %908 = vmatprep.subr.mxu0 0.0
  %909 = vmatpush2.msra.mxu0 0.0
  %910 = vmatprep.subr.mxu0 0.0
  %911 = vmatpush2.msra.mxu0 0.0
  %912 = vmatprep.subr.mxu0 0.0
  %913 = vmatpush2.msra.mxu0 0.0
  %914 = vmatprep.subr.mxu0 0.0
  %915 = vmatpush2.msra.mxu0 0.0
  %916 = vmatprep.subr.mxu0 0.0
  %917 = vmatpush2.msra.mxu0 0.0
  %918 = vmatprep.subr.mxu0 0.0
  %919 = vmatpush2.msra.mxu0 0.0
  %920 = vmatprep.subr.mxu0 0.0
  %921 = vmatpush2.msra.mxu0 0.0
  %922 = vmatprep.subr.mxu0 0.0
  %923 = vmatpush2.msra.mxu0 0.0
  %924 = vmatprep.subr.mxu0 0.0
  %925 = vmatpush2.msra.mxu0 0.0
  %926 = vmatprep.subr.mxu0 0.0
  %927 = vmatpush2.msra.mxu0 0.0
  %928 = vmatprep.subr.mxu0 0.0
  %929 = vmatpush2.msra.mxu0 0.0
  %930 = vmatprep.subr.mxu0 0.0
  %931 = vmatpush2.msra.mxu0 0.0
  %932 = vmatprep.subr.mxu0 0.0
  %933 = vmatpush2.msra.mxu0 0.0
  %934 = vmatprep.mubr.f32.mxu0 0.0
  %935 = vmatmul.mubr.f32.gmra.mxu0 %v868
  %v936 = vpop.f32.mrf.mxu0
  %v937 = vadd.f32 %v247, %v936
  %v938 = vpop.f32.mrf.mxu0
  %939 = vdwg.mxu0
  %v940 = vmax.f32 %v937, 0.0
  %v941 = vlaneseq
  %v942 = vshrl.u32 %v941, 7
  %v943 = vsub.s32 2, %v942
  %v944 = vrot.slane %v26, %v943
  %v945 = vmul.f32 %v940, %v944
  %vm946 = vcmask 261120
  %v947 = vsel %vm946, %v945, 0.0
  %948 = vadd.xlane.f32.xlu0 %v947
  %v949 = vpop.xlane.xlu0 %948
  %v950 = vlaneseq
  %v951 = vshrl.u32 %v950, 7
  %v952 = vsub.s32 3, %v951
  %v953 = vrot.slane %v26, %v952
  %v954 = vadd.f32 %v949, %v953
  %vm955 = vcmask 7168
  %956 = vst.msk [vmem:[%s7] sm:$0xff] %vm955, %v954
  // Predicated region
  $region30: #{qnetwork_rnn_forward.1} parent=0 // pred_check
    _
  $region31: #{qnetwork_rnn_forward.1} parent=0 // pred_check_branch
    %958 = sbr.rel (0) target = $region33
  $region32: #{qnetwork_rnn_forward.1} parent=0 // pred_region
    _
  $region33: #{qnetwork_rnn_forward.1} parent=0 // pred_fallthru
    _
  // Predicated region
  $region34: #{qnetwork_rnn_forward.1} parent=0 // pred_check
    _
  $region35: #{qnetwork_rnn_forward.1} parent=0 // pred_check_branch
    %960 = sbr.rel (0) target = $region37
  $region36: #{qnetwork_rnn_forward.1} parent=0 // pred_region
    _
  $region37: #{qnetwork_rnn_forward.1} parent=0 // pred_fallthru
    _

</llo_original>
